<compile_context>
chip_gen: v7x
topology: tpu7x:2x2x1
jax: 0.10.0
libtpu: 0.0.40
codegen_flags: <defaults>
</compile_context>

<pallas_src>
import jax
import jax.numpy as jnp
from jax.experimental import pallas as pl
from jax.experimental.pallas import tpu as pltpu

LN_EPS = 1e-5       # nn.LayerNorm default eps
L2_EPS = 1e-12      # F.normalize default eps


def sent_encoder_kernel(x_ref, o_ref):
    # Load one (tile_rows, embed_dim) block, compute in f32.
    x = x_ref[...].astype(jnp.float32)
    d = x.shape[-1]

    # --- LayerNorm (elementwise_affine=False) over last dim ---
    mean = jnp.mean(x, axis=-1, keepdims=True)
    xc = x - mean
    var = jnp.mean(xc * xc, axis=-1, keepdims=True)        # biased variance (PyTorch LN)
    inv_std = jax.lax.rsqrt(var + LN_EPS)
    xn = xc * inv_std

    # --- F.normalize(p=2, dim=-1) ---
    # sum(xn^2) = sum(xc^2) / (var + eps) = D * var / (var + eps); avoids a third
    # XLU cross-lane reduce and a full VALU pass over the tile.
    l2 = jnp.sqrt(d * var * (inv_std * inv_std))
    y = xn / jnp.maximum(l2, L2_EPS)

    o_ref[...] = y.astype(o_ref.dtype)


def _pick_tile_rows(batch, embed_dim, itemsize):
    """Batch-tile size: multiple of the sublane packing, sized to fit VMEM on every gen."""
    # f32 -> 8 rows/vreg, bf16 -> 16, int8/fp8 -> 32.
    row_mult = max(8, 32 // max(itemsize, 1))
    # Keep 2-deep double-buffering of (input + output) tiles under ~16 MiB so it fits the
    # default scoped VMEM limit on every generation (v7x: 64 MiB physical / 32 MiB scoped).
    budget_bytes = 16 << 20
    tb = budget_bytes // max(4 * embed_dim * 4, 1)   # 2 bufs x (in + out), 4 B/elem (conservative)
    tb = min(tb, 1024)                               # diminishing returns past ~512-1024 rows
    tb = max(row_mult, (tb // row_mult) * row_mult)
    if tb >= batch:
        return batch                                 # single block == full array dims (always legal)
    return tb


def sent_encoder(caption_embeds, tile_rows=None):
    """caption_embeds: (batch, embed_dim) -> (batch, embed_dim)."""
    batch, embed_dim = caption_embeds.shape
    itemsize = jnp.dtype(caption_embeds.dtype).itemsize
    tb = tile_rows if tile_rows is not None else _pick_tile_rows(batch, embed_dim, itemsize)
    grid = (pl.cdiv(batch, tb),)

    # NOTE: if the production embed_dim is small (<128) or not a multiple of 128, output
    # stores are lane-masked; padding embed_dim to 128 (or transposing so batch maps to
    # lanes) would help — with embed_dim a multiple of 128 this is a no-op.
    return pl.pallas_call(
        sent_encoder_kernel,
        out_shape=jax.ShapeDtypeStruct((batch, embed_dim), caption_embeds.dtype),
        grid=grid,
        in_specs=[pl.BlockSpec((tb, embed_dim), lambda i: (i, 0))],
        out_specs=pl.BlockSpec((tb, embed_dim), lambda i: (i, 0)),
        compiler_params=pltpu.CompilerParams(
            dimension_semantics=("parallel",),        # rows independent; shards across TCs on v7x
            vmem_limit_bytes=48 << 20,                # headroom over default scoped limit, safe on v7x
        ),
    )(caption_embeds)


def sent_encoder_ref(caption_embeds):
    x = caption_embeds.astype(jnp.float32)
    mean = jnp.mean(x, axis=-1, keepdims=True)
    var = jnp.mean((x - mean) ** 2, axis=-1, keepdims=True)
    xn = (x - mean) / jnp.sqrt(var + LN_EPS)
    l2 = jnp.linalg.norm(xn, axis=-1, keepdims=True)
    return (xn / jnp.maximum(l2, L2_EPS)).astype(caption_embeds.dtype)


if __name__ == "__main__":
    key = jax.random.PRNGKey(0)

    # Small shape matching the module's forward (caption_embed_dim == embed_dim).
    batch, embed_dim = 4, 32
    caption_embeds = jax.random.normal(key, (batch, embed_dim), dtype=jnp.float32)
    out = jax.block_until_ready(sent_encoder(caption_embeds))
    ref = sent_encoder_ref(caption_embeds)
    assert out.shape == (batch, embed_dim)
    assert jnp.allclose(out, ref, atol=1e-5, rtol=1e-5), "mismatch vs reference (single block)"

    # Exercise the multi-tile (grid > 1) path with a forced small batch tile.
    key2 = jax.random.PRNGKey(1)
    batch2, embed_dim2 = 24, 256
    x2 = jax.random.normal(key2, (batch2, embed_dim2), dtype=jnp.float32)
    out2 = jax.block_until_ready(sent_encoder(x2, tile_rows=8))
    ref2 = sent_encoder_ref(x2)
    assert out2.shape == (batch2, embed_dim2)
    assert jnp.allclose(out2, ref2, atol=1e-5, rtol=1e-5), "mismatch vs reference (tiled)"

    print("KERNEL_OK")
</pallas_src>

<mosaic_0001>
module attributes {stable_mosaic.version = 11 : i64} {
  func.func @sent_encoder_kernel(%arg0: i32, %arg1: memref<4x32xf32, #tpu.memory_space<vmem>>, %arg2: memref<4x32xf32, #tpu.memory_space<vmem>>) attributes {dimension_semantics = [#tpu.dimension_semantics<parallel>], iteration_bounds = array<i64: 1>, scalar_prefetch = 0 : i64, scratch_operands = 0 : i64, tpu.core_type = #tpu.core_type<tc>, window_params = [{transform_indices = @transform_0, window_bounds = array<i64: 4, 32>}, {transform_indices = @transform_1, window_bounds = array<i64: 4, 32>}]} {
    %c0 = arith.constant 0 : index
    %c0_0 = arith.constant 0 : index
    %0 = vector.load %arg1[%c0, %c0_0] : memref<4x32xf32, #tpu.memory_space<vmem>>, vector<4x32xf32>
    %cst = arith.constant dense<0.000000e+00> : vector<4xf32>
    %1 = vector.multi_reduction <add>, %0, %cst [1] : vector<4x32xf32> to vector<4xf32>
    %2 = vector.shape_cast %1 : vector<4xf32> to vector<4x1xf32>
    %cst_1 = arith.constant 3.200000e+01 : f32
    %3 = vector.broadcast %cst_1 : f32 to vector<4x1xf32>
    %4 = arith.divf %2, %3 : vector<4x1xf32>
    %5 = vector.broadcast %4 : vector<4x1xf32> to vector<4x32xf32>
    %6 = arith.subf %0, %5 : vector<4x32xf32>
    %7 = arith.mulf %6, %6 : vector<4x32xf32>
    %cst_2 = arith.constant dense<0.000000e+00> : vector<4xf32>
    %8 = vector.multi_reduction <add>, %7, %cst_2 [1] : vector<4x32xf32> to vector<4xf32>
    %9 = vector.shape_cast %8 : vector<4xf32> to vector<4x1xf32>
    %cst_3 = arith.constant 3.200000e+01 : f32
    %10 = vector.broadcast %cst_3 : f32 to vector<4x1xf32>
    %11 = arith.divf %9, %10 : vector<4x1xf32>
    %cst_4 = arith.constant 9.99999974E-6 : f32
    %12 = vector.broadcast %cst_4 : f32 to vector<4x1xf32>
    %13 = arith.addf %11, %12 : vector<4x1xf32>
    %14 = math.rsqrt %13 : vector<4x1xf32>
    %15 = vector.broadcast %14 : vector<4x1xf32> to vector<4x32xf32>
    %16 = arith.mulf %6, %15 : vector<4x32xf32>
    %cst_5 = arith.constant 3.200000e+01 : f32
    %17 = vector.broadcast %cst_5 : f32 to vector<4x1xf32>
    %18 = arith.mulf %17, %11 : vector<4x1xf32>
    %19 = arith.mulf %14, %14 : vector<4x1xf32>
    %20 = arith.mulf %18, %19 : vector<4x1xf32>
    %21 = math.sqrt %20 : vector<4x1xf32>
    %cst_6 = arith.constant 9.99999996E-13 : f32
    %22 = vector.broadcast %cst_6 : f32 to vector<4x1xf32>
    %23 = arith.maximumf %21, %22 : vector<4x1xf32>
    %24 = vector.broadcast %23 : vector<4x1xf32> to vector<4x32xf32>
    %25 = arith.divf %16, %24 : vector<4x32xf32>
    %c0_7 = arith.constant 0 : index
    %c0_8 = arith.constant 0 : index
    %26 = vector.load %arg2[%c0_7, %c0_8] : memref<4x32xf32, #tpu.memory_space<vmem>>, vector<4x32xf32>
    tpu.vector_store %arg2[%c0_7, %c0_8], %25 {strides = array<i32>} : memref<4x32xf32, #tpu.memory_space<vmem>>, vector<4x32xf32>,
    return
  }
  func.func @transform_0(%arg0: i32) -> (i32, i32) {
    %c0_i32 = arith.constant 0 : i32
    %c0_i32_0 = arith.constant 0 : i32
    return %arg0, %c0_i32 : i32, i32
  }
  func.func @transform_1(%arg0: i32) -> (i32, i32) {
    %c0_i32 = arith.constant 0 : i32
    %c0_i32_0 = arith.constant 0 : i32
    return %arg0, %c0_i32 : i32, i32
  }
}

</mosaic_0001>

<llo_original>
// kernel: tpu_custom_call.1
$region0: #{tpu_custom_call.1}
  #allocation0 [shape = 'u32[]', space=smem, size = 0x4, offset = 0x4, fixed_abs, tag = 'smem constant byte address 0x4 - core index']
  #allocation1 [shape = 'u32[144,128]{1,0:T(1,128)}', space=vmem, size = 0x12000, scoped, tag = 'internal scratch']
  %s0 = inlined_call_operand.hbm [shape: f32[4,32], index: 0, kind: input, shape index: {}]
  %s1 = inlined_call_operand.hbm [shape: f32[4,32], index: 1, kind: output, shape index: {}]
  %s2 = sld [smem:[#allocation0]]
  $region18: #{tpu_custom_call.1} parent=0
    _
  %s4 = ssub.s32 1, %s2
  %s5 = scalar_select 0, %s4, %s2
  $region1: #{tpu_custom_call.1} parent=0
    #allocation2 [shape = 'u8[2048]{0}', space=vmem, size = 0x800, scoped, tag = 'input window, operand 0, single buffered']
    #allocation3 [shape = 's32[1]{0}', space=sflag, size = 0x4, scoped, tag = 'scoped memory for tpu_custom_call.1']
    #allocation4 [shape = 's32[1]{0}', space=sflag, size = 0x4, scoped, tag = 'scoped memory for tpu_custom_call.1']
    #allocation5 [shape = 'u8[2048]{0}', space=vmem, size = 0x800, scoped, tag = 'output window, operand 0, single buffered']
    %6 = vsyncpa [#allocation3], 0
    %7 = vsyncpa [#allocation4], 0
    // Predicated region
    $region2: #{tpu_custom_call.1} parent=1 // pred_check
      _
    $region3: #{tpu_custom_call.1} parent=1 // pred_check_branch
      %9 = sbr.rel (0) target = $region5
    $region4: #{tpu_custom_call.1} parent=1 // pred_region
      %s11 = ssub.s32 64, 64
      %12 = vsyncadd [#allocation3], %s11
      %s14 = sshll.u32 [#allocation2], 4
      %s15 = int_to_ptr.vmem [resolvable:$true] %s14
      %17 = dma.hbm_to_vmem [thread:$0]  %s0, 64, %s15, [#allocation3]
    $region5: #{tpu_custom_call.1} parent=1 // pred_fallthru
      _
    // Predicated region
    $region6: #{tpu_custom_call.1} parent=1 // pred_check
      _
    $region7: #{tpu_custom_call.1} parent=1 // pred_check_branch
      %19 = sbr.rel (0) target = $region9
    $region8: #{tpu_custom_call.1} parent=1 // pred_region
      %20 = dma.done [#allocation3], 64
    $region9: #{tpu_custom_call.1} parent=1 // pred_fallthru
      _
    %v21 = vld [vmem:[#allocation2] sm:$0xf]
    %vm22 = vcmask 257024
    %v23 = vsel %vm22, %v21, 0.0
    %24 = vadd.xlane.f32.xlu0 %v23
    %v25 = vpop.xlane.xlu0 %24
    %v26 = vrcp.pop 32.0
    %v27 = vmul.f32 %v25, %v26
    %v28 = vsub.f32 %v21, %v27
    %v29 = vmul.f32 %v28, %v28
    %v30 = vsel %vm22, %v29, 0.0
    %31 = vadd.xlane.f32.xlu0 %v30
    %v32 = vpop.xlane.xlu0 %31
    %v33 = vmul.f32 %v32, %v26
    %v34 = vadd.f32 %v33, 1e-05
    %v35 = vrsqrt.pop %v34
    %v36 = vmul.f32 %v28, %v35
    %v37 = vmul.f32 %v33, 32.0
    %v38 = vmul.f32 %v35, %v35
    %v39 = vmul.f32 %v37, %v38
    %v40 = vrsqrt.pop %v39
    %v41 = vmul.f32 %v39, %v40
    %vm42 = vcmp.eq.f32.partialorder %v39, inf
    %v43 = vsel %vm42, %v39, %v41
    %vm44 = vcmp.eq.f32.partialorder %v39, 0.0
    %v45 = vand.u32 %v39, 2147483648
    %v46 = vsel %vm44, %v45, %v43
    %v47 = vmax.f32 %v46, 1e-12
    %v48 = vrcp.pop %v47
    %v49 = vmul.f32 %v36, %v48
    %50 = vst.msk [vmem:[#allocation5] sm:$0xf] %vm22, %v49
    // Predicated region
    $region10: #{tpu_custom_call.1} parent=1 // pred_check
      _
    $region11: #{tpu_custom_call.1} parent=1 // pred_check_branch
      %52 = sbr.rel (0) target = $region13
    $region12: #{tpu_custom_call.1} parent=1 // pred_region
      %s54 = ssub.s32 64, 64
      %55 = vsyncadd [#allocation4], %s54
      %s57 = sshll.u32 [#allocation5], 4
      %s58 = int_to_ptr.vmem [resolvable:$true] %s57
      %60 = dma.vmem_to_hbm [thread:$0]  %s58, 64, %s1, [#allocation4]
    $region13: #{tpu_custom_call.1} parent=1 // pred_fallthru
      _
    // Predicated region
    $region14: #{tpu_custom_call.1} parent=1 // pred_check
      _
    $region15: #{tpu_custom_call.1} parent=1 // pred_check_branch
      %62 = sbr.rel (0) target = $region17
    $region16: #{tpu_custom_call.1} parent=1 // pred_region
      %63 = dma.done [#allocation4], 64
    $region17: #{tpu_custom_call.1} parent=1 // pred_fallthru
      _
    %64 = vsyncpa [#allocation3], 1
    %65 = vsyncpa [#allocation4], 1

</llo_original>
